<compile_context>
chip_gen: v6e
topology: v6e:2x2x1
jax: 0.10.0
libtpu: 0.0.40
codegen_flags: <defaults>
</compile_context>

<pallas_src>
import functools

import jax
import jax.numpy as jnp
from jax.experimental import pallas as pl
from jax.experimental.pallas import tpu as pltpu

LN_EPS = 1e-5  # torch.nn.LayerNorm default


def _head_kernel(x_ref, gamma_ref, beta_ref, w_ref, b_ref, o_ref, acc_ref, *,
                 seq_len, ts):
    s = pl.program_id(1)
    n_s = pl.num_programs(1)

    @pl.when(s == 0)
    def _init():
        acc_ref[...] = jnp.zeros_like(acc_ref)

    has_remainder = (seq_len % ts) != 0  # static (Python) — picks the codegen path once

    if has_remainder:
        # Hot path: every S step except the last is a plain, unmasked partial sum.
        @pl.when(s != n_s - 1)
        def _accumulate_plain():
            acc_ref[...] += jnp.sum(x_ref[...].astype(jnp.float32), axis=1)

        # Only the single remainder tile pays for iota + select; garbage rows are
        # neutralized with a select (never multiply-by-mask) so NaN/Inf stays contained.
        @pl.when(s == n_s - 1)
        def _accumulate_masked():
            x = x_ref[...].astype(jnp.float32)                        # (TB, TS, E)
            row = jax.lax.broadcasted_iota(jnp.int32, (1, ts, 1), 1) + s * ts
            x = jnp.where(row < seq_len, x, 0.0)
            acc_ref[...] += jnp.sum(x, axis=1)
    else:
        acc_ref[...] += jnp.sum(x_ref[...].astype(jnp.float32), axis=1)

    @pl.when(s == n_s - 1)
    def _finalize():
        # Mean over the true S, applied once to the accumulated sum.
        pooled = acc_ref[...] * jnp.float32(1.0 / seq_len)            # (TB, E)

        # LayerNorm over embed dim (biased variance, eps = 1e-5).
        mu = jnp.mean(pooled, axis=-1, keepdims=True)
        var = jnp.mean((pooled - mu) ** 2, axis=-1, keepdims=True)
        normed = (pooled - mu) * jax.lax.rsqrt(var + LN_EPS)
        normed = normed * gamma_ref[...].astype(jnp.float32) + beta_ref[...].astype(jnp.float32)

        # Linear: cast the small LHS to the weight's dtype (bf16 fast path when weights are
        # bf16); never up-cast the full (E, Cpad) weight tile. Accumulation stays f32.
        logits = jnp.dot(normed.astype(w_ref.dtype), w_ref[...],
                         preferred_element_type=jnp.float32)
        o_ref[...] = (logits + b_ref[...].astype(jnp.float32)).astype(o_ref.dtype)


def prepare_params(gamma, beta, w, b, *, weight_dtype=None):
    """Pad/reshape parameters ONCE at load time (not per forward call).

    gamma/beta: (E,)  LayerNorm params
    w:          (C, E) torch nn.Linear weight layout
    b:          (C,)
    weight_dtype: optional dtype for the padded weight (use jnp.bfloat16 in production).
    Returns (gamma2, beta2, w_pad, b_pad, num_classes).
    """
    E = gamma.shape[0]
    C = w.shape[0]
    c_pad = pl.cdiv(C, 128) * 128                            # lane-dense output width
    wd = weight_dtype if weight_dtype is not None else w.dtype

    gamma2 = gamma.reshape(1, E).astype(jnp.float32)
    beta2 = beta.reshape(1, E).astype(jnp.float32)
    w_t = jnp.asarray(w, wd).T                               # (E, C)
    w_pad = jnp.zeros((E, c_pad), wd).at[:, :C].set(w_t)     # padded cols are exactly zero
    b_pad = jnp.zeros((1, c_pad), jnp.float32).at[0, :C].set(b.astype(jnp.float32))
    return gamma2, beta2, w_pad, b_pad, C


def classification_head(x, gamma2, beta2, w_pad, b_pad, num_classes, *,
                        tb=None, ts=None, tile_bytes=4 * 1024 * 1024):
    """x: (B, S, E) -> (B, num_classes). Params must come from prepare_params()."""
    B, S, E = x.shape
    c_pad = w_pad.shape[1]
    itemsize = x.dtype.itemsize

    # Batch tile: large enough to amortize the per-tile finalize (LN + matmul + store),
    # but keep n_b >= 2 when B allows so v7x's second TensorCore gets work.
    if tb is None:
        tb = min(B, 128)
        if tb == B and B >= 16:
            tb = max(8, ((B // 2) // 8) * 8)                 # multiple of 8 -> valid out block
    n_b = pl.cdiv(B, tb)

    # Sequence tile: target ~tile_bytes per streamed x tile (4 MiB default; use ~8 MiB on v7x).
    if ts is None:
        ts = tile_bytes // max(1, tb * E * itemsize)
        ts = max(8, (ts // 8) * 8)
        ts = min(ts, pl.cdiv(S, 8) * 8)
    n_s = pl.cdiv(S, ts)

    # Deeper x pipelining only if S forces short per-step DMAs.
    x_tile_bytes = tb * ts * E * itemsize
    x_buffers = 3 if (x_tile_bytes < (1 << 20) and n_s > 2) else 2

    # Explicit VMEM budget (x stream + single-buffered weight + small residents + out + acc),
    # so v5e's 16 MiB scoped default never silently truncates, capped at v7x's 64 MiB physical.
    vmem_needed = (
        x_buffers * x_tile_bytes
        + w_pad.size * w_pad.dtype.itemsize
        + (gamma2.size + beta2.size) * 4
        + b_pad.size * b_pad.dtype.itemsize
        + 2 * tb * c_pad * itemsize
        + tb * E * 4
    )
    vmem_limit = min(64 * 1024 * 1024,
                     max(32 * 1024 * 1024, int(vmem_needed * 1.5) + (2 << 20)))

    kernel = functools.partial(_head_kernel, seq_len=S, ts=ts)

    out_pad = pl.pallas_call(
        kernel,
        out_shape=jax.ShapeDtypeStruct((B, c_pad), x.dtype),
        grid_spec=pltpu.PrefetchScalarGridSpec(
            num_scalar_prefetch=0,
            grid=(n_b, n_s),
            in_specs=[
                # x: streamed over S, multi-buffered.
                pl.BlockSpec((tb, ts, E), lambda i, s: (i, s, 0),
                             pipeline_mode=pl.Buffered(x_buffers)),
                # Resident params: constant index_map + single-buffered (DMA'd once).
                pl.BlockSpec((1, E), lambda i, s: (0, 0),
                             pipeline_mode=pl.Buffered(1)),
                pl.BlockSpec((1, E), lambda i, s: (0, 0),
                             pipeline_mode=pl.Buffered(1)),
                pl.BlockSpec((E, c_pad), lambda i, s: (0, 0),
                             pipeline_mode=pl.Buffered(1)),
                pl.BlockSpec((1, c_pad), lambda i, s: (0, 0),
                             pipeline_mode=pl.Buffered(1)),
            ],
            out_specs=pl.BlockSpec((tb, c_pad), lambda i, s: (i, 0)),
            scratch_shapes=[pltpu.VMEM((tb, E), jnp.float32)],   # seq-sum accumulator
        ),
        compiler_params=pltpu.CompilerParams(
            dimension_semantics=("parallel", "arbitrary"),
            vmem_limit_bytes=vmem_limit,
        ),
    )(x, gamma2, beta2, w_pad, b_pad)

    return out_pad[:, :num_classes]


def _reference(x, gamma, beta, w, b):
    pooled = jnp.mean(x.astype(jnp.float32), axis=-2)
    mu = jnp.mean(pooled, axis=-1, keepdims=True)
    var = jnp.mean((pooled - mu) ** 2, axis=-1, keepdims=True)
    normed = (pooled - mu) / jnp.sqrt(var + LN_EPS)
    normed = normed * gamma + beta
    return normed @ w.T + b


if __name__ == "__main__":
    key = jax.random.PRNGKey(0)
    B, S, E, C = 2, 8, 32, 10   # batch, seq, embed_size, num_classes

    kx, kw, kb, kg, kbeta = jax.random.split(key, 5)
    x = jax.random.normal(kx, (B, S, E), dtype=jnp.float32)

    # Parameters matching nn.LayerNorm(E) + nn.Linear(E, C) (torch layout: weight is (C, E)).
    gamma = 1.0 + 0.01 * jax.random.normal(kg, (E,), dtype=jnp.float32)
    beta = 0.01 * jax.random.normal(kbeta, (E,), dtype=jnp.float32)
    w = jax.random.normal(kw, (C, E), dtype=jnp.float32) / jnp.sqrt(E)
    b = 0.01 * jax.random.normal(kb, (C,), dtype=jnp.float32)

    # Pad / reshape params once (f32 here to verify against the f32 reference;
    # use weight_dtype=jnp.bfloat16 in production for the MXU fast path).
    gamma2, beta2, w_pad, b_pad, num_classes = prepare_params(gamma, beta, w, b)

    out = classification_head(x, gamma2, beta2, w_pad, b_pad, num_classes)
    out = jax.block_until_ready(out)

    ref = _reference(x, gamma, beta, w, b)
    assert out.shape == (B, C), out.shape
    assert jnp.allclose(out, ref, atol=1e-4, rtol=1e-4), "mismatch vs reference"

    print("KERNEL_OK")
</pallas_src>

<mosaic_0001>
module attributes {stable_mosaic.version = 11 : i64} {
  func.func @_head_kernel(%arg0: i32, %arg1: i32, %arg2: memref<2x8x32xf32, #tpu.memory_space<vmem>>, %arg3: memref<1x32xf32, #tpu.memory_space<vmem>>, %arg4: memref<1x32xf32, #tpu.memory_space<vmem>>, %arg5: memref<32x128xf32, #tpu.memory_space<vmem>>, %arg6: memref<1x128xf32, #tpu.memory_space<vmem>>, %arg7: memref<2x128xf32, #tpu.memory_space<vmem>>, %arg8: memref<2x32xf32, #tpu.memory_space<vmem>>) attributes {dimension_semantics = [#tpu.dimension_semantics<parallel>, #tpu.dimension_semantics<arbitrary>], iteration_bounds = array<i64: 1, 1>, scalar_prefetch = 0 : i64, scratch_operands = 1 : i64, tpu.core_type = #tpu.core_type<tc>, window_params = [{pipeline_mode = #tpu.pipeline_mode<double_buffered>, transform_indices = @transform_0, window_bounds = array<i64: 2, 8, 32>}, {pipeline_mode = #tpu.pipeline_mode<synchronous>, transform_indices = @transform_1, window_bounds = array<i64: 1, 32>}, {pipeline_mode = #tpu.pipeline_mode<synchronous>, transform_indices = @transform_2, window_bounds = array<i64: 1, 32>}, {pipeline_mode = #tpu.pipeline_mode<synchronous>, transform_indices = @transform_3, window_bounds = array<i64: 32, 128>}, {pipeline_mode = #tpu.pipeline_mode<synchronous>, transform_indices = @transform_4, window_bounds = array<i64: 1, 128>}, {transform_indices = @transform_5, window_bounds = array<i64: 2, 128>}]} {
    %c0_i32 = arith.constant 0 : i32
    %0 = arith.cmpi eq, %arg1, %c0_i32 : i32
    %1 = arith.extui %0 : i1 to i32
    %c0_i32_0 = arith.constant 0 : i32
    %2 = arith.cmpi ne, %1, %c0_i32_0 : i32
    scf.if %2 {
      %cst_9 = arith.constant 0.000000e+00 : f32
      %11 = vector.broadcast %cst_9 : f32 to vector<2x32xf32>
      %c0_10 = arith.constant 0 : index
      %c0_11 = arith.constant 0 : index
      %12 = vector.load %arg8[%c0_10, %c0_11] : memref<2x32xf32, #tpu.memory_space<vmem>>, vector<2x32xf32>
      tpu.vector_store %arg8[%c0_10, %c0_11], %11 {strides = array<i32>} : memref<2x32xf32, #tpu.memory_space<vmem>>, vector<2x32xf32>,
    } else {
    }
    %c0 = arith.constant 0 : index
    %c0_1 = arith.constant 0 : index
    %3 = vector.load %arg8[%c0, %c0_1] : memref<2x32xf32, #tpu.memory_space<vmem>>, vector<2x32xf32>
    %c0_2 = arith.constant 0 : index
    %c0_3 = arith.constant 0 : index
    %c0_4 = arith.constant 0 : index
    %4 = vector.load %arg2[%c0_2, %c0_3, %c0_4] : memref<2x8x32xf32, #tpu.memory_space<vmem>>, vector<2x8x32xf32>
    %cst = arith.constant dense<0.000000e+00> : vector<2x32xf32>
    %5 = vector.multi_reduction <add>, %4, %cst [1] : vector<2x8x32xf32> to vector<2x32xf32>
    %6 = arith.addf %3, %5 : vector<2x32xf32>
    %c0_5 = arith.constant 0 : index
    %c0_6 = arith.constant 0 : index
    %7 = vector.load %arg8[%c0_5, %c0_6] : memref<2x32xf32, #tpu.memory_space<vmem>>, vector<2x32xf32>
    tpu.vector_store %arg8[%c0_5, %c0_6], %6 {strides = array<i32>} : memref<2x32xf32, #tpu.memory_space<vmem>>, vector<2x32xf32>,
    %c0_i32_7 = arith.constant 0 : i32
    %8 = arith.cmpi eq, %arg1, %c0_i32_7 : i32
    %9 = arith.extui %8 : i1 to i32
    %c0_i32_8 = arith.constant 0 : i32
    %10 = arith.cmpi ne, %9, %c0_i32_8 : i32
    scf.if %10 {
      %c0_9 = arith.constant 0 : index
      %c0_10 = arith.constant 0 : index
      %11 = vector.load %arg8[%c0_9, %c0_10] : memref<2x32xf32, #tpu.memory_space<vmem>>, vector<2x32xf32>
      %cst_11 = arith.constant 1.250000e-01 : f32
      %12 = vector.broadcast %cst_11 : f32 to vector<2x32xf32>
      %13 = arith.mulf %11, %12 : vector<2x32xf32>
      %cst_12 = arith.constant dense<0.000000e+00> : vector<2xf32>
      %14 = vector.multi_reduction <add>, %13, %cst_12 [1] : vector<2x32xf32> to vector<2xf32>
      %15 = vector.shape_cast %14 : vector<2xf32> to vector<2x1xf32>
      %cst_13 = arith.constant 3.200000e+01 : f32
      %16 = vector.broadcast %cst_13 : f32 to vector<2x1xf32>
      %17 = arith.divf %15, %16 : vector<2x1xf32>
      %18 = vector.broadcast %17 : vector<2x1xf32> to vector<2x32xf32>
      %19 = arith.subf %13, %18 : vector<2x32xf32>
      %20 = arith.mulf %19, %19 : vector<2x32xf32>
      %cst_14 = arith.constant dense<0.000000e+00> : vector<2xf32>
      %21 = vector.multi_reduction <add>, %20, %cst_14 [1] : vector<2x32xf32> to vector<2xf32>
      %22 = vector.shape_cast %21 : vector<2xf32> to vector<2x1xf32>
      %cst_15 = arith.constant 3.200000e+01 : f32
      %23 = vector.broadcast %cst_15 : f32 to vector<2x1xf32>
      %24 = arith.divf %22, %23 : vector<2x1xf32>
      %25 = vector.broadcast %17 : vector<2x1xf32> to vector<2x32xf32>
      %26 = arith.subf %13, %25 : vector<2x32xf32>
      %cst_16 = arith.constant 9.99999974E-6 : f32
      %27 = vector.broadcast %cst_16 : f32 to vector<2x1xf32>
      %28 = arith.addf %24, %27 : vector<2x1xf32>
      %29 = math.rsqrt %28 : vector<2x1xf32>
      %30 = vector.broadcast %29 : vector<2x1xf32> to vector<2x32xf32>
      %31 = arith.mulf %26, %30 : vector<2x32xf32>
      %c0_17 = arith.constant 0 : index
      %c0_18 = arith.constant 0 : index
      %32 = vector.load %arg3[%c0_17, %c0_18] : memref<1x32xf32, #tpu.memory_space<vmem>>, vector<1x32xf32>
      %33 = vector.broadcast %32 : vector<1x32xf32> to vector<2x32xf32>
      %34 = arith.mulf %31, %33 : vector<2x32xf32>
      %c0_19 = arith.constant 0 : index
      %c0_20 = arith.constant 0 : index
      %35 = vector.load %arg4[%c0_19, %c0_20] : memref<1x32xf32, #tpu.memory_space<vmem>>, vector<1x32xf32>
      %36 = vector.broadcast %35 : vector<1x32xf32> to vector<2x32xf32>
      %37 = arith.addf %34, %36 : vector<2x32xf32>
      %c0_21 = arith.constant 0 : index
      %c0_22 = arith.constant 0 : index
      %38 = vector.load %arg5[%c0_21, %c0_22] : memref<32x128xf32, #tpu.memory_space<vmem>>, vector<32x128xf32>
      %cst_23 = arith.constant dense<0.000000e+00> : vector<2x128xf32>
      %39 = tpu.matmul %37, %38, %cst_23 {dimension_numbers = #tpu.dot_dimension_numbers<[1], [0], [0], [1], [0, 0, 1, 1], [], []>} : vector<2x32xf32>, vector<32x128xf32>, vector<2x128xf32> -> vector<2x128xf32>
      %c0_24 = arith.constant 0 : index
      %c0_25 = arith.constant 0 : index
      %40 = vector.load %arg6[%c0_24, %c0_25] : memref<1x128xf32, #tpu.memory_space<vmem>>, vector<1x128xf32>
      %41 = vector.broadcast %40 : vector<1x128xf32> to vector<2x128xf32>
      %42 = arith.addf %39, %41 : vector<2x128xf32>
      %c0_26 = arith.constant 0 : index
      %c0_27 = arith.constant 0 : index
      %43 = vector.load %arg7[%c0_26, %c0_27] : memref<2x128xf32, #tpu.memory_space<vmem>>, vector<2x128xf32>
      tpu.vector_store %arg7[%c0_26, %c0_27], %42 {strides = array<i32>} : memref<2x128xf32, #tpu.memory_space<vmem>>, vector<2x128xf32>,
    } else {
    }
    return
  }
  func.func @transform_0(%arg0: i32, %arg1: i32) -> (i32, i32, i32) {
    %c0_i32 = arith.constant 0 : i32
    %c0_i32_0 = arith.constant 0 : i32
    return %arg0, %arg1, %c0_i32 : i32, i32, i32
  }
  func.func @transform_1(%arg0: i32, %arg1: i32) -> (i32, i32) {
    %c0_i32 = arith.constant 0 : i32
    %c0_i32_0 = arith.constant 0 : i32
    %c0_i32_1 = arith.constant 0 : i32
    return %c0_i32, %c0_i32_0 : i32, i32
  }
  func.func @transform_2(%arg0: i32, %arg1: i32) -> (i32, i32) {
    %c0_i32 = arith.constant 0 : i32
    %c0_i32_0 = arith.constant 0 : i32
    %c0_i32_1 = arith.constant 0 : i32
    return %c0_i32, %c0_i32_0 : i32, i32
  }
  func.func @transform_3(%arg0: i32, %arg1: i32) -> (i32, i32) {
    %c0_i32 = arith.constant 0 : i32
    %c0_i32_0 = arith.constant 0 : i32
    %c0_i32_1 = arith.constant 0 : i32
    return %c0_i32, %c0_i32_0 : i32, i32
  }
  func.func @transform_4(%arg0: i32, %arg1: i32) -> (i32, i32) {
    %c0_i32 = arith.constant 0 : i32
    %c0_i32_0 = arith.constant 0 : i32
    %c0_i32_1 = arith.constant 0 : i32
    return %c0_i32, %c0_i32_0 : i32, i32
  }
  func.func @transform_5(%arg0: i32, %arg1: i32) -> (i32, i32) {
    %c0_i32 = arith.constant 0 : i32
    %c0_i32_0 = arith.constant 0 : i32
    return %arg0, %c0_i32 : i32, i32
  }
}

</mosaic_0001>

<llo_original>
// kernel: tpu_custom_call.1
$region0: #{tpu_custom_call.1}
  #allocation0 [shape = 'u32[]', space=smem, size = 0x4, offset = 0x4, fixed_abs, tag = 'smem constant byte address 0x4 - core index']
  #allocation1 [shape = 'u32[144,128]{1,0:T(1,128)}', space=vmem, size = 0x12000, scoped, tag = 'internal scratch']
  #allocation2 [shape = 'f32[2,32]{1,0:T(2,128)}', space=vmem, size = 0x400, scoped, tag = 'scratch operand']
  %s0 = inlined_call_operand.hbm [shape: f32[2,8,32], index: 0, kind: input, shape index: {}]
  %s1 = inlined_call_operand.vmem [shape: f32[1,32], index: 1, kind: input, shape index: {}]
  %s2 = inlined_call_operand.vmem [shape: f32[1,32], index: 2, kind: input, shape index: {}]
  %s3 = inlined_call_operand.hbm [shape: f32[32,128], index: 3, kind: input, shape index: {}]
  %s4 = inlined_call_operand.vmem [shape: f32[1,128], index: 4, kind: input, shape index: {}]
  %s5 = inlined_call_operand.hbm [shape: f32[2,128], index: 5, kind: output, shape index: {}]
  %s6 = sld [smem:[#allocation0]]
  $region46: #{tpu_custom_call.1} parent=0
    _
  %s8 = ssub.s32 1, %s6
  %s9 = scalar_select 0, %s8, %s6
  $region1: #{tpu_custom_call.1} parent=0
    #allocation3 [shape = 'u8[8192]{0}', space=vmem, size = 0x2000, scoped, tag = 'input window, operand 0, single buffered']
    #allocation4 [shape = 's32[1]{0}', space=sflag, size = 0x4, scoped, tag = 'scoped memory for tpu_custom_call.1']
    #allocation5 [shape = 's32[1]{0}', space=sflag, size = 0x4, scoped, tag = 'scoped memory for tpu_custom_call.1']
    #allocation6 [shape = 'u8[16384]{0}', space=vmem, size = 0x4000, scoped, tag = 'input window, operand 3, single buffered']
    #allocation7 [shape = 's32[1]{0}', space=sflag, size = 0x4, scoped, tag = 'scoped memory for tpu_custom_call.1']
    #allocation8 [shape = 'u8[1024]{0}', space=vmem, size = 0x400, scoped, tag = 'output window, operand 0, single buffered']
    %10 = vsyncpa [#allocation4], 0
    %11 = vsyncpa [#allocation7], 0
    %12 = vsyncpa [#allocation5], 0
    // Predicated region
    $region2: #{tpu_custom_call.1} parent=1 // pred_check
      _
    $region3: #{tpu_custom_call.1} parent=1 // pred_check_branch
      %14 = sbr.rel (0) target = $region5
    $region4: #{tpu_custom_call.1} parent=1 // pred_region
      %s16 = ssub.s32 256, 256
      %17 = vsyncadd [#allocation4], %s16
      %s18 = sshll.u32 [#allocation3], 4
      %s19 = int_to_ptr.vmem [resolvable:$true] %s18
      %24 = dma.hbm_to_vmem [thread:$0]  %s0, 256, %s19, [#allocation4], 128, 128, 8
    $region5: #{tpu_custom_call.1} parent=1 // pred_fallthru
      _
    // Predicated region
    $region6: #{tpu_custom_call.1} parent=1 // pred_check
      _
    $region7: #{tpu_custom_call.1} parent=1 // pred_check_branch
      %26 = sbr.rel (0) target = $region9
    $region8: #{tpu_custom_call.1} parent=1 // pred_region
      _
    $region9: #{tpu_custom_call.1} parent=1 // pred_fallthru
      _
    // Predicated region
    $region10: #{tpu_custom_call.1} parent=1 // pred_check
      _
    $region11: #{tpu_custom_call.1} parent=1 // pred_check_branch
      %28 = sbr.rel (0) target = $region13
    $region12: #{tpu_custom_call.1} parent=1 // pred_region
      _
    $region13: #{tpu_custom_call.1} parent=1 // pred_fallthru
      _
    // Predicated region
    $region14: #{tpu_custom_call.1} parent=1 // pred_check
      _
    $region15: #{tpu_custom_call.1} parent=1 // pred_check_branch
      %30 = sbr.rel (0) target = $region17
    $region16: #{tpu_custom_call.1} parent=1 // pred_region
      %s32 = ssub.s32 512, 512
      %33 = vsyncadd [#allocation7], %s32
      %s34 = sshll.u32 [#allocation6], 4
      %s35 = int_to_ptr.vmem [resolvable:$true] %s34
      %40 = dma.hbm_to_vmem [thread:$0]  %s3, 512, %s35, [#allocation7], 128, 128, 8
    $region17: #{tpu_custom_call.1} parent=1 // pred_fallthru
      _
    // Predicated region
    $region18: #{tpu_custom_call.1} parent=1 // pred_check
      _
    $region19: #{tpu_custom_call.1} parent=1 // pred_check_branch
      %42 = sbr.rel (0) target = $region21
    $region20: #{tpu_custom_call.1} parent=1 // pred_region
      _
    $region21: #{tpu_custom_call.1} parent=1 // pred_fallthru
      _
    // Predicated region
    $region22: #{tpu_custom_call.1} parent=1 // pred_check
      _
    $region23: #{tpu_custom_call.1} parent=1 // pred_check_branch
      %44 = sbr.rel (0) target = $region25
    $region24: #{tpu_custom_call.1} parent=1 // pred_region
      %45 = dma.done [#allocation4], 256
    $region25: #{tpu_custom_call.1} parent=1 // pred_fallthru
      _
    // Predicated region
    $region26: #{tpu_custom_call.1} parent=1 // pred_check
      _
    $region27: #{tpu_custom_call.1} parent=1 // pred_check_branch
      %47 = sbr.rel (0) target = $region29
    $region28: #{tpu_custom_call.1} parent=1 // pred_region
      %48 = dma.done [#allocation7], 512
    $region29: #{tpu_custom_call.1} parent=1 // pred_fallthru
      _
    %p49 = scmp.eq.s32.totalorder 0, 0
    // Predicated region
    $region30: #{tpu_custom_call.1} parent=1 // pred_check
      %p50 = pneg %p49
    $region31: #{tpu_custom_call.1} parent=1 // pred_check_branch
      %52 = sbr.rel (%p50) target = $region33
    $region32: #{tpu_custom_call.1} parent=1 // pred_region
      %vm53 = vcmask 254976
      %54 = vst.msk [vmem:[#allocation2] sm:$0x3] %vm53, 0.0
    $region33: #{tpu_custom_call.1} parent=1 // pred_fallthru
      _
    %v55 = vld [vmem:[#allocation2] sm:$0x3]
    %v56 = vld [vmem:[#allocation3] sm:$0xff]
    %v57 = vld [vmem:[#allocation3 + $0x8] sm:$0xff]
    %vm58 = vcmask 261120
    %v59 = vsel %vm58, %v56, 0.0
    %v60 = vrot.slane %v59, 4
    %v61 = vadd.f32 %v59, %v60
    %v62 = vrot.slane %v61, 2
    %v63 = vadd.f32 %v61, %v62
    %v64 = vrot.slane %v63, 1
    %v65 = vadd.f32 %v63, %v64
    %v66 = vsel %vm58, %v57, 0.0
    %v67 = vrot.slane %v66, 4
    %v68 = vadd.f32 %v66, %v67
    %v69 = vrot.slane %v68, 2
    %v70 = vadd.f32 %v68, %v69
    %v71 = vrot.slane %v70, 1
    %v72 = vadd.f32 %v70, %v71
    %vm75 = vcmask 1041409
    %v76 = vsel %vm75, %v72, %v65
    %v78 = vadd.f32 %v55, %v76
    %vm79 = vcmask 254976
    %80 = vst.msk [vmem:[#allocation2] sm:$0x3] %vm79, %v78
    // Predicated region
    $region34: #{tpu_custom_call.1} parent=1 // pred_check
      %p81 = pneg %p49
    $region35: #{tpu_custom_call.1} parent=1 // pred_check_branch
      %83 = sbr.rel (%p81) target = $region37
    $region36: #{tpu_custom_call.1} parent=1 // pred_region
      %v84 = vld [vmem:[#allocation2] sm:$0x3]
      %v85 = vmul.f32 %v84, 0.125
      %v86 = vsel %vm79, %v85, 0.0
      %87 = vadd.xlane.f32.xlu0 %v86
      %v88 = vpop.xlane.xlu0 %87
      %v89 = vrcp.pop 32.0
      %v90 = vmul.f32 %v88, %v89
      %v91 = vsub.f32 %v85, %v90
      %v92 = vmul.f32 %v91, %v91
      %v93 = vsel %vm79, %v92, 0.0
      %94 = vadd.xlane.f32.xlu0 %v93
      %v95 = vpop.xlane.xlu0 %94
      %v96 = vmul.f32 %v95, %v89
      %v97 = vadd.f32 %v96, 1e-05
      %v98 = vrsqrt.pop %v97
      %v99 = vmul.f32 %v91, %v98
      %v100 = vld [vmem:[%s1] sm:$0x1]
      %v102 = vlaneseq
      %v103 = vshrl.u32 %v102, 7
      %v104 = vsub.s32 0, %v103
      %v105 = vrot.slane %v100, %v104
      %v107 = vmul.f32 %v99, %v105
      %v108 = vld [vmem:[%s2] sm:$0x1]
      %v110 = vlaneseq
      %v111 = vshrl.u32 %v110, 7
      %v112 = vsub.s32 0, %v111
      %v113 = vrot.slane %v108, %v112
      %v115 = vadd.f32 %v107, %v113
      %v116 = vld [vmem:[#allocation6] sm:$0xff]
      %v117 = vld [vmem:[#allocation6 + $0x8] sm:$0xff]
      %v118 = vld [vmem:[#allocation6 + $0x10] sm:$0xff]
      %v119 = vld [vmem:[#allocation6 + $0x18] sm:$0xff]
      %v120 = vld [vmem:[%s4] sm:$0x1]
      %v122 = vlaneseq
      %v123 = vshrl.u32 %v122, 7
      %v124 = vsub.s32 0, %v123
      %v125 = vrot.slane %v120, %v124
      %v128 = vsel %vm58, %v115, 0
      %130 = vmatprep.subr.mxu0 0.0
      %131 = vmatpush1.msra.mxu0 0.0
      %132 = vmatprep.subr.mxu0 0.0
      %133 = vmatpush1.msra.mxu0 0.0
      %134 = vmatprep.subr.mxu0 0.0
      %135 = vmatpush1.msra.mxu0 0.0
      %136 = vmatprep.subr.mxu0 0.0
      %137 = vmatpush1.msra.mxu0 0.0
      %138 = vmatprep.subr.mxu0 0.0
      %139 = vmatpush1.msra.mxu0 0.0
      %140 = vmatprep.subr.mxu0 0.0
      %141 = vmatpush1.msra.mxu0 0.0
      %142 = vmatprep.subr.mxu0 0.0
      %143 = vmatpush1.msra.mxu0 0.0
      %144 = vmatprep.subr.mxu0 0.0
      %145 = vmatpush1.msra.mxu0 0.0
      %146 = vmatprep.subr.mxu0 0.0
      %147 = vmatpush1.msra.mxu0 0.0
      %148 = vmatprep.subr.mxu0 0.0
      %149 = vmatpush1.msra.mxu0 0.0
      %150 = vmatprep.subr.mxu0 0.0
      %151 = vmatpush1.msra.mxu0 0.0
      %152 = vmatprep.subr.mxu0 0.0
      %153 = vmatpush1.msra.mxu0 0.0
      %154 = vmatprep.subr.mxu0 0.0
      %155 = vmatpush1.msra.mxu0 %v119
      %156 = vmatprep.subr.mxu0 0.0
      %157 = vmatpush1.msra.mxu0 %v118
      %158 = vmatprep.subr.mxu0 0.0
      %159 = vmatpush1.msra.mxu0 %v117
      %160 = vmatprep.subr.mxu0 0.0
      %161 = vmatpush1.msra.mxu0 %v116
      %162 = vmatprep.subr.mxu0 0.0
      %163 = vmatpush2.msra.mxu0 0.0
      %164 = vmatprep.subr.mxu0 0.0
      %165 = vmatpush2.msra.mxu0 0.0
      %166 = vmatprep.subr.mxu0 0.0
      %167 = vmatpush2.msra.mxu0 0.0
      %168 = vmatprep.subr.mxu0 0.0
      %169 = vmatpush2.msra.mxu0 0.0
      %170 = vmatprep.subr.mxu0 0.0
      %171 = vmatpush2.msra.mxu0 0.0
      %172 = vmatprep.subr.mxu0 0.0
      %173 = vmatpush2.msra.mxu0 0.0
      %174 = vmatprep.subr.mxu0 0.0
      %175 = vmatpush2.msra.mxu0 0.0
      %176 = vmatprep.subr.mxu0 0.0
      %177 = vmatpush2.msra.mxu0 0.0
      %178 = vmatprep.subr.mxu0 0.0
      %179 = vmatpush2.msra.mxu0 0.0
      %180 = vmatprep.subr.mxu0 0.0
      %181 = vmatpush2.msra.mxu0 0.0
      %182 = vmatprep.subr.mxu0 0.0
      %183 = vmatpush2.msra.mxu0 0.0
      %184 = vmatprep.subr.mxu0 0.0
      %185 = vmatpush2.msra.mxu0 0.0
      %186 = vmatprep.subr.mxu0 0.0
      %187 = vmatpush2.msra.mxu0 0.0
      %188 = vmatprep.subr.mxu0 0.0
      %189 = vmatpush2.msra.mxu0 0.0
      %190 = vmatprep.subr.mxu0 0.0
      %191 = vmatpush2.msra.mxu0 0.0
      %192 = vmatprep.subr.mxu0 0.0
      %193 = vmatpush2.msra.mxu0 0.0
      %194 = vmatprep.mubr.f32.mxu0 0.0
      %195 = vmatmul.mubr.f32.gmra.mxu0 %v128
      %v196 = vpop.f32.mrf.mxu0
      %v197 = vadd.f32 %v125, %v196
      %v198 = vpop.f32.mrf.mxu0
      %199 = vdwg.mxu0
      %200 = vst [vmem:[#allocation8] sm:$0x3] %v197
    $region37: #{tpu_custom_call.1} parent=1 // pred_fallthru
      _
    // Predicated region
    $region38: #{tpu_custom_call.1} parent=1 // pred_check
      _
    $region39: #{tpu_custom_call.1} parent=1 // pred_check_branch
      %202 = sbr.rel (0) target = $region41
    $region40: #{tpu_custom_call.1} parent=1 // pred_region
      %s204 = ssub.s32 32, 32
      %205 = vsyncadd [#allocation5], %s204
      %s207 = sshll.u32 [#allocation8], 4
      %s208 = int_to_ptr.vmem [resolvable:$true] %s207
      %210 = dma.vmem_to_hbm [thread:$0]  %s208, 32, %s5, [#allocation5]
    $region41: #{tpu_custom_call.1} parent=1 // pred_fallthru
      _
    // Predicated region
    $region42: #{tpu_custom_call.1} parent=1 // pred_check
      _
    $region43: #{tpu_custom_call.1} parent=1 // pred_check_branch
      %212 = sbr.rel (0) target = $region45
    $region44: #{tpu_custom_call.1} parent=1 // pred_region
      %213 = dma.done [#allocation5], 32
    $region45: #{tpu_custom_call.1} parent=1 // pred_fallthru
      _
    %214 = vsyncpa [#allocation4], 1
    %215 = vsyncpa [#allocation7], 1
    %216 = vsyncpa [#allocation5], 1

</llo_original>
